<compile_context>
chip_gen: v7x
topology: tpu7x:2x2x1
jax: 0.10.0
libtpu: 0.0.40
codegen_flags: <defaults>
</compile_context>

<pallas_src>
import functools

import jax
import jax.numpy as jnp
from jax.experimental import pallas as pl
from jax.experimental.pallas import tpu as pltpu

LEAKY_SLOPE = 0.01  # nn.LeakyReLU default negative_slope


def _leaky_relu(x):
    # max(x, a*x) == leaky_relu(x) for 0 < a < 1; single VPU max op.
    return jnp.maximum(x, LEAKY_SLOPE * x)


def _make_ffn_kernel(num_inputs, num_layers):
    """Build the fused MLP kernel body.

    Ref order: x_0..x_{ni-1}, w1_0..w1_{ni-1}, b1, (w_l, b_l) for layers 2..L, out.
    """

    def kernel(*refs):
        x_refs = refs[:num_inputs]
        w1_refs = refs[num_inputs:2 * num_inputs]
        b1_ref = refs[2 * num_inputs]
        tail = refs[2 * num_inputs + 1:-1]
        o_ref = refs[-1]

        # Layer 1: concat(xs) @ W1  ==  sum_i x_i @ W1_chunk_i (concat fused away).
        # Native-dtype operands into the MXU, f32 accumulation.
        h = jnp.dot(x_refs[0][...], w1_refs[0][...],
                    preferred_element_type=jnp.float32)
        for x_ref, w_ref in zip(x_refs[1:], w1_refs[1:]):
            h = h + jnp.dot(x_ref[...], w_ref[...],
                            preferred_element_type=jnp.float32)
        h = h + b1_ref[...].astype(jnp.float32)

        # Layers 2..L: LeakyReLU then Linear; no nonlinearity after the last Linear.
        for l in range(num_layers - 1):
            w_ref = tail[2 * l]
            b_ref = tail[2 * l + 1]
            h = _leaky_relu(h)
            h = jnp.dot(h.astype(w_ref.dtype), w_ref[...],
                        preferred_element_type=jnp.float32)
            h = h + b_ref[...].astype(jnp.float32)

        o_ref[...] = h.astype(o_ref.dtype)

    return kernel


def feedforward(params, *xs, tile_b=1024, out_dtype=None):
    """Fused FeedForward forward pass.

    params: list of (W, b) with W of shape (fan_in, fan_out) (== torch weight.T)
    xs:     2-D activations (B, d_i), concatenated logically along axis=1.
    """
    assert len(xs) >= 1 and len(params) >= 1
    B = xs[0].shape[0]
    d_out = params[-1][0].shape[1]
    out_dtype = out_dtype if out_dtype is not None else xs[0].dtype

    # Fuse torch.cat(xs, axis=1) into layer 1 by splitting W1 into row blocks.
    w1, b1 = params[0]
    d_chunks = [x.shape[1] for x in xs]
    assert sum(d_chunks) == w1.shape[0], "sum of input widths must equal d_in"
    w1_chunks = []
    off = 0
    for d in d_chunks:
        w1_chunks.append(w1[off:off + d])
        off += d

    # Batch tiling: big row tiles amortize the ~0.35us/step grid overhead and
    # keep the kernel on the HBM-bandwidth roofline. Small B -> single tile.
    if B <= tile_b:
        tb = B                      # block == full dim, always legal
    else:
        tb = max(8, (tile_b // 8) * 8)  # sublane-aligned; cdiv masks last tile
    grid = (pl.cdiv(B, tb),)

    def batch_map(i):
        return (i, 0)

    def const_map(i):               # constant block index -> stays VMEM-resident
        return (0, 0)

    operands = list(xs) + w1_chunks + [b1]
    in_specs = (
        [pl.BlockSpec((tb, x.shape[1]), batch_map) for x in xs]
        + [pl.BlockSpec(w.shape, const_map) for w in w1_chunks]
        + [pl.BlockSpec(b1.shape, const_map)]
    )
    for w, b in params[1:]:
        operands += [w, b]
        in_specs += [pl.BlockSpec(w.shape, const_map),
                     pl.BlockSpec(b.shape, const_map)]

    kernel = _make_ffn_kernel(len(xs), len(params))

    return pl.pallas_call(
        kernel,
        out_shape=jax.ShapeDtypeStruct((B, d_out), out_dtype),
        grid=grid,
        in_specs=in_specs,
        out_specs=pl.BlockSpec((tb, d_out), batch_map),
        compiler_params=pltpu.CompilerParams(
            dimension_semantics=("parallel",)),
    )(*operands)


def init_feedforward_params(key, d_in, d_out, h_dims=(32, 32), dtype=jnp.float32):
    """Deterministic init mimicking nn.Linear's U(-1/sqrt(fan_in), 1/sqrt(fan_in))."""
    all_dims = [d_in] + list(h_dims) + [d_out]
    params = []
    for i in range(len(all_dims) - 1):
        fan_in, fan_out = all_dims[i], all_dims[i + 1]
        key, kw, kb = jax.random.split(key, 3)
        bound = 1.0 / jnp.sqrt(jnp.asarray(fan_in, jnp.float32))
        # stored as (fan_in, fan_out) == PyTorch weight.T
        w = jax.random.uniform(kw, (fan_in, fan_out), dtype, -bound, bound)
        b = jax.random.uniform(kb, (1, fan_out), dtype, -bound, bound)
        params.append((w, b))
    return params


def feedforward_ref(params, *xs):
    x = jnp.concatenate(xs, axis=1)
    h = x
    for i, (w, b) in enumerate(params):
        h = h @ w + b
        if i < len(params) - 1:
            h = jnp.where(h > 0, h, LEAKY_SLOPE * h)
    return h


if __name__ == "__main__":
    key = jax.random.PRNGKey(0)
    kp, kx1, kx2 = jax.random.split(key, 3)

    # Two inputs concatenated along axis=1: (8, 6) + (8, 10) -> d_in = 16
    B, d1, d2, d_out = 8, 6, 10, 8
    d_in = d1 + d2

    params = init_feedforward_params(kp, d_in, d_out, h_dims=(32, 32))
    x1 = jax.random.normal(kx1, (B, d1), jnp.float32)
    x2 = jax.random.normal(kx2, (B, d2), jnp.float32)

    fwd = jax.jit(feedforward)

    out = jax.block_until_ready(fwd(params, x1, x2))
    ref = feedforward_ref(params, x1, x2)
    assert out.shape == (B, d_out), out.shape
    assert jnp.allclose(out, ref, atol=1e-5, rtol=1e-5), "mismatch vs reference (small)"

    # Larger, non-divisible batch exercises the tiled/pipelined path
    # (grid = cdiv(1030, 256) = 5, masked last tile).
    B2 = 1030
    kx3, kx4 = jax.random.split(kx2)
    y1 = jax.random.normal(kx3, (B2, d1), jnp.float32)
    y2 = jax.random.normal(kx4, (B2, d2), jnp.float32)

    fwd_tiled = jax.jit(functools.partial(feedforward, tile_b=256))
    out2 = jax.block_until_ready(fwd_tiled(params, y1, y2))
    ref2 = feedforward_ref(params, y1, y2)
    assert out2.shape == (B2, d_out), out2.shape
    assert jnp.allclose(out2, ref2, atol=1e-4, rtol=1e-4), "mismatch vs reference (tiled)"

    # Default tile size path on the larger batch (single tile, full-B block).
    out3 = jax.block_until_ready(fwd(params, y1, y2))
    assert jnp.allclose(out3, ref2, atol=1e-4, rtol=1e-4), "mismatch vs reference (1-tile)"

    print("KERNEL_OK")
</pallas_src>

<mosaic_0001>
module attributes {stable_mosaic.version = 11 : i64} {
  func.func @kernel(%arg0: i32, %arg1: memref<8x6xf32, #tpu.memory_space<vmem>>, %arg2: memref<8x10xf32, #tpu.memory_space<vmem>>, %arg3: memref<6x32xf32, #tpu.memory_space<vmem>>, %arg4: memref<10x32xf32, #tpu.memory_space<vmem>>, %arg5: memref<1x32xf32, #tpu.memory_space<vmem>>, %arg6: memref<32x32xf32, #tpu.memory_space<vmem>>, %arg7: memref<1x32xf32, #tpu.memory_space<vmem>>, %arg8: memref<32x8xf32, #tpu.memory_space<vmem>>, %arg9: memref<1x8xf32, #tpu.memory_space<vmem>>, %arg10: memref<8x8xf32, #tpu.memory_space<vmem>>) attributes {dimension_semantics = [#tpu.dimension_semantics<parallel>], iteration_bounds = array<i64: 1>, scalar_prefetch = 0 : i64, scratch_operands = 0 : i64, tpu.core_type = #tpu.core_type<tc>, window_params = [{transform_indices = @transform_0, window_bounds = array<i64: 8, 6>}, {transform_indices = @transform_1, window_bounds = array<i64: 8, 10>}, {pipeline_mode = #tpu.pipeline_mode<synchronous>, transform_indices = @transform_2, window_bounds = array<i64: 6, 32>}, {pipeline_mode = #tpu.pipeline_mode<synchronous>, transform_indices = @transform_3, window_bounds = array<i64: 10, 32>}, {pipeline_mode = #tpu.pipeline_mode<synchronous>, transform_indices = @transform_4, window_bounds = array<i64: 1, 32>}, {pipeline_mode = #tpu.pipeline_mode<synchronous>, transform_indices = @transform_5, window_bounds = array<i64: 32, 32>}, {pipeline_mode = #tpu.pipeline_mode<synchronous>, transform_indices = @transform_6, window_bounds = array<i64: 1, 32>}, {pipeline_mode = #tpu.pipeline_mode<synchronous>, transform_indices = @transform_7, window_bounds = array<i64: 32, 8>}, {pipeline_mode = #tpu.pipeline_mode<synchronous>, transform_indices = @transform_8, window_bounds = array<i64: 1, 8>}, {transform_indices = @transform_9, window_bounds = array<i64: 8, 8>}]} {
    %c0 = arith.constant 0 : index
    %c0_0 = arith.constant 0 : index
    %0 = vector.load %arg1[%c0, %c0_0] : memref<8x6xf32, #tpu.memory_space<vmem>>, vector<8x6xf32>
    %c0_1 = arith.constant 0 : index
    %c0_2 = arith.constant 0 : index
    %1 = vector.load %arg3[%c0_1, %c0_2] : memref<6x32xf32, #tpu.memory_space<vmem>>, vector<6x32xf32>
    %cst = arith.constant dense<0.000000e+00> : vector<8x32xf32>
    %2 = tpu.matmul %0, %1, %cst {dimension_numbers = #tpu.dot_dimension_numbers<[1], [0], [0], [1], [0, 0, 1, 1], [], []>} : vector<8x6xf32>, vector<6x32xf32>, vector<8x32xf32> -> vector<8x32xf32>
    %c0_3 = arith.constant 0 : index
    %c0_4 = arith.constant 0 : index
    %3 = vector.load %arg2[%c0_3, %c0_4] : memref<8x10xf32, #tpu.memory_space<vmem>>, vector<8x10xf32>
    %c0_5 = arith.constant 0 : index
    %c0_6 = arith.constant 0 : index
    %4 = vector.load %arg4[%c0_5, %c0_6] : memref<10x32xf32, #tpu.memory_space<vmem>>, vector<10x32xf32>
    %cst_7 = arith.constant dense<0.000000e+00> : vector<8x32xf32>
    %5 = tpu.matmul %3, %4, %cst_7 {dimension_numbers = #tpu.dot_dimension_numbers<[1], [0], [0], [1], [0, 0, 1, 1], [], []>} : vector<8x10xf32>, vector<10x32xf32>, vector<8x32xf32> -> vector<8x32xf32>
    %6 = arith.addf %2, %5 : vector<8x32xf32>
    %c0_8 = arith.constant 0 : index
    %c0_9 = arith.constant 0 : index
    %7 = vector.load %arg5[%c0_8, %c0_9] : memref<1x32xf32, #tpu.memory_space<vmem>>, vector<1x32xf32>
    %8 = vector.broadcast %7 : vector<1x32xf32> to vector<8x32xf32>
    %9 = arith.addf %6, %8 : vector<8x32xf32>
    %cst_10 = arith.constant 0.00999999977 : f32
    %10 = vector.broadcast %cst_10 : f32 to vector<8x32xf32>
    %11 = arith.mulf %10, %9 : vector<8x32xf32>
    %12 = arith.maximumf %9, %11 : vector<8x32xf32>
    %c0_11 = arith.constant 0 : index
    %c0_12 = arith.constant 0 : index
    %13 = vector.load %arg6[%c0_11, %c0_12] : memref<32x32xf32, #tpu.memory_space<vmem>>, vector<32x32xf32>
    %cst_13 = arith.constant dense<0.000000e+00> : vector<8x32xf32>
    %14 = tpu.matmul %12, %13, %cst_13 {dimension_numbers = #tpu.dot_dimension_numbers<[1], [0], [0], [1], [0, 0, 1, 1], [], []>} : vector<8x32xf32>, vector<32x32xf32>, vector<8x32xf32> -> vector<8x32xf32>
    %c0_14 = arith.constant 0 : index
    %c0_15 = arith.constant 0 : index
    %15 = vector.load %arg7[%c0_14, %c0_15] : memref<1x32xf32, #tpu.memory_space<vmem>>, vector<1x32xf32>
    %16 = vector.broadcast %15 : vector<1x32xf32> to vector<8x32xf32>
    %17 = arith.addf %14, %16 : vector<8x32xf32>
    %cst_16 = arith.constant 0.00999999977 : f32
    %18 = vector.broadcast %cst_16 : f32 to vector<8x32xf32>
    %19 = arith.mulf %18, %17 : vector<8x32xf32>
    %20 = arith.maximumf %17, %19 : vector<8x32xf32>
    %c0_17 = arith.constant 0 : index
    %c0_18 = arith.constant 0 : index
    %21 = vector.load %arg8[%c0_17, %c0_18] : memref<32x8xf32, #tpu.memory_space<vmem>>, vector<32x8xf32>
    %cst_19 = arith.constant dense<0.000000e+00> : vector<8x8xf32>
    %22 = tpu.matmul %20, %21, %cst_19 {dimension_numbers = #tpu.dot_dimension_numbers<[1], [0], [0], [1], [0, 0, 1, 1], [], []>} : vector<8x32xf32>, vector<32x8xf32>, vector<8x8xf32> -> vector<8x8xf32>
    %c0_20 = arith.constant 0 : index
    %c0_21 = arith.constant 0 : index
    %23 = vector.load %arg9[%c0_20, %c0_21] : memref<1x8xf32, #tpu.memory_space<vmem>>, vector<1x8xf32>
    %24 = vector.broadcast %23 : vector<1x8xf32> to vector<8x8xf32>
    %25 = arith.addf %22, %24 : vector<8x8xf32>
    %c0_22 = arith.constant 0 : index
    %c0_23 = arith.constant 0 : index
    %26 = vector.load %arg10[%c0_22, %c0_23] : memref<8x8xf32, #tpu.memory_space<vmem>>, vector<8x8xf32>
    tpu.vector_store %arg10[%c0_22, %c0_23], %25 {strides = array<i32>} : memref<8x8xf32, #tpu.memory_space<vmem>>, vector<8x8xf32>,
    return
  }
  func.func @transform_0(%arg0: i32) -> (i32, i32) {
    %c0_i32 = arith.constant 0 : i32
    %c0_i32_0 = arith.constant 0 : i32
    return %arg0, %c0_i32 : i32, i32
  }
  func.func @transform_1(%arg0: i32) -> (i32, i32) {
    %c0_i32 = arith.constant 0 : i32
    %c0_i32_0 = arith.constant 0 : i32
    return %arg0, %c0_i32 : i32, i32
  }
  func.func @transform_2(%arg0: i32) -> (i32, i32) {
    %c0_i32 = arith.constant 0 : i32
    %c0_i32_0 = arith.constant 0 : i32
    %c0_i32_1 = arith.constant 0 : i32
    return %c0_i32, %c0_i32_0 : i32, i32
  }
  func.func @transform_3(%arg0: i32) -> (i32, i32) {
    %c0_i32 = arith.constant 0 : i32
    %c0_i32_0 = arith.constant 0 : i32
    %c0_i32_1 = arith.constant 0 : i32
    return %c0_i32, %c0_i32_0 : i32, i32
  }
  func.func @transform_4(%arg0: i32) -> (i32, i32) {
    %c0_i32 = arith.constant 0 : i32
    %c0_i32_0 = arith.constant 0 : i32
    %c0_i32_1 = arith.constant 0 : i32
    return %c0_i32, %c0_i32_0 : i32, i32
  }
  func.func @transform_5(%arg0: i32) -> (i32, i32) {
    %c0_i32 = arith.constant 0 : i32
    %c0_i32_0 = arith.constant 0 : i32
    %c0_i32_1 = arith.constant 0 : i32
    return %c0_i32, %c0_i32_0 : i32, i32
  }
  func.func @transform_6(%arg0: i32) -> (i32, i32) {
    %c0_i32 = arith.constant 0 : i32
    %c0_i32_0 = arith.constant 0 : i32
    %c0_i32_1 = arith.constant 0 : i32
    return %c0_i32, %c0_i32_0 : i32, i32
  }
  func.func @transform_7(%arg0: i32) -> (i32, i32) {
    %c0_i32 = arith.constant 0 : i32
    %c0_i32_0 = arith.constant 0 : i32
    %c0_i32_1 = arith.constant 0 : i32
    return %c0_i32, %c0_i32_0 : i32, i32
  }
  func.func @transform_8(%arg0: i32) -> (i32, i32) {
    %c0_i32 = arith.constant 0 : i32
    %c0_i32_0 = arith.constant 0 : i32
    %c0_i32_1 = arith.constant 0 : i32
    return %c0_i32, %c0_i32_0 : i32, i32
  }
  func.func @transform_9(%arg0: i32) -> (i32, i32) {
    %c0_i32 = arith.constant 0 : i32
    %c0_i32_0 = arith.constant 0 : i32
    return %arg0, %c0_i32 : i32, i32
  }
}

</mosaic_0001>

<llo_original>
// kernel: feedforward.1
$region0: #{feedforward.1}
  #allocation0 [shape = 'u32[]', space=smem, size = 0x4, offset = 0x4, fixed_abs, tag = 'smem constant byte address 0x4 - core index']
  #allocation1 [shape = 'u32[144,128]{1,0:T(1,128)}', space=vmem, size = 0x12000, scoped, tag = 'internal scratch']
  %s0 = inlined_call_operand.vmem [shape: f32[8,6], index: 0, kind: input, shape index: {}]
  %s1 = inlined_call_operand.vmem [shape: f32[8,10], index: 1, kind: input, shape index: {}]
  %s2 = inlined_call_operand.vmem [shape: f32[6,32], index: 2, kind: input, shape index: {}]
  %s3 = inlined_call_operand.vmem [shape: f32[10,32], index: 3, kind: input, shape index: {}]
  %s4 = inlined_call_operand.vmem [shape: f32[1,32], index: 4, kind: input, shape index: {}]
  %s5 = inlined_call_operand.vmem [shape: f32[32,32], index: 5, kind: input, shape index: {}]
  %s6 = inlined_call_operand.vmem [shape: f32[1,32], index: 6, kind: input, shape index: {}]
  %s7 = inlined_call_operand.vmem [shape: f32[32,8], index: 7, kind: input, shape index: {}]
  %s8 = inlined_call_operand.vmem [shape: f32[1,8], index: 8, kind: input, shape index: {}]
  %s9 = inlined_call_operand.hbm [shape: f32[8,8], index: 9, kind: output, shape index: {}]
  %s10 = sld [smem:[#allocation0]]
  $region46: #{feedforward.1} parent=0
    _
  %s12 = ssub.s32 1, %s10
  %s13 = scalar_select 0, %s12, %s10
  $region1: #{feedforward.1} parent=0
    #allocation2 [shape = 'u8[4096]{0}', space=vmem, size = 0x1000, scoped, tag = 'output window, operand 0, single buffered']
    #allocation3 [shape = 's32[1]{0}', space=sflag, size = 0x4, scoped, tag = 'scoped memory for feedforward.1']
    %14 = vsyncpa [#allocation3], 0
    // Predicated region
    $region2: #{feedforward.1} parent=1 // pred_check
      _
    $region3: #{feedforward.1} parent=1 // pred_check_branch
      %16 = sbr.rel (0) target = $region5
    $region4: #{feedforward.1} parent=1 // pred_region
      _
    $region5: #{feedforward.1} parent=1 // pred_fallthru
      _
    // Predicated region
    $region6: #{feedforward.1} parent=1 // pred_check
      _
    $region7: #{feedforward.1} parent=1 // pred_check_branch
      %18 = sbr.rel (0) target = $region9
    $region8: #{feedforward.1} parent=1 // pred_region
      _
    $region9: #{feedforward.1} parent=1 // pred_fallthru
      _
    // Predicated region
    $region10: #{feedforward.1} parent=1 // pred_check
      _
    $region11: #{feedforward.1} parent=1 // pred_check_branch
      %20 = sbr.rel (0) target = $region13
    $region12: #{feedforward.1} parent=1 // pred_region
      _
    $region13: #{feedforward.1} parent=1 // pred_fallthru
      _
    // Predicated region
    $region14: #{feedforward.1} parent=1 // pred_check
      _
    $region15: #{feedforward.1} parent=1 // pred_check_branch
      %22 = sbr.rel (0) target = $region17
    $region16: #{feedforward.1} parent=1 // pred_region
      _
    $region17: #{feedforward.1} parent=1 // pred_fallthru
      _
    // Predicated region
    $region18: #{feedforward.1} parent=1 // pred_check
      _
    $region19: #{feedforward.1} parent=1 // pred_check_branch
      %24 = sbr.rel (0) target = $region21
    $region20: #{feedforward.1} parent=1 // pred_region
      _
    $region21: #{feedforward.1} parent=1 // pred_fallthru
      _
    // Predicated region
    $region22: #{feedforward.1} parent=1 // pred_check
      _
    $region23: #{feedforward.1} parent=1 // pred_check_branch
      %26 = sbr.rel (0) target = $region25
    $region24: #{feedforward.1} parent=1 // pred_region
      _
    $region25: #{feedforward.1} parent=1 // pred_fallthru
      _
    // Predicated region
    $region26: #{feedforward.1} parent=1 // pred_check
      _
    $region27: #{feedforward.1} parent=1 // pred_check_branch
      %28 = sbr.rel (0) target = $region29
    $region28: #{feedforward.1} parent=1 // pred_region
      _
    $region29: #{feedforward.1} parent=1 // pred_fallthru
      _
    // Predicated region
    $region30: #{feedforward.1} parent=1 // pred_check
      _
    $region31: #{feedforward.1} parent=1 // pred_check_branch
      %30 = sbr.rel (0) target = $region33
    $region32: #{feedforward.1} parent=1 // pred_region
      _
    $region33: #{feedforward.1} parent=1 // pred_fallthru
      _
    // Predicated region
    $region34: #{feedforward.1} parent=1 // pred_check
      _
    $region35: #{feedforward.1} parent=1 // pred_check_branch
      %32 = sbr.rel (0) target = $region37
    $region36: #{feedforward.1} parent=1 // pred_region
      _
    $region37: #{feedforward.1} parent=1 // pred_fallthru
      _
    %v33 = vld [vmem:[%s0] sm:$0xff]
    %v34 = vld [vmem:[%s2] sm:$0x3f]
    %v35 = vld [vmem:[%s1] sm:$0xff]
    %v36 = vld [vmem:[%s3] sm:$0xff]
    %v37 = vld [vmem:[%s3 + $0x8] sm:$0x3]
    %vm38 = vcmask 80896
    %v40 = vsel %vm38, %v35, 0
    %vm42 = vcmask 1041408
    %v44 = vsel %vm42, %v37, 0
    %46 = vmatprep.subr.mxu0 0.0
    %47 = vmatpush1.msra.mxu0 %v36
    %48 = vmatprep.subr.mxu0 0.0
    %49 = vmatpush1.msra.mxu0 %v44
    %50 = vmatprep.subr.mxu0 0.0
    %51 = vmatpush1.msra.mxu0 0.0
    %52 = vmatprep.subr.mxu0 0.0
    %53 = vmatpush1.msra.mxu0 0.0
    %54 = vmatprep.subr.mxu0 0.0
    %55 = vmatpush1.msra.mxu0 0.0
    %56 = vmatprep.subr.mxu0 0.0
    %57 = vmatpush1.msra.mxu0 0.0
    %58 = vmatprep.subr.mxu0 0.0
    %59 = vmatpush1.msra.mxu0 0.0
    %60 = vmatprep.subr.mxu0 0.0
    %61 = vmatpush1.msra.mxu0 0.0
    %62 = vmatprep.subr.mxu0 0.0
    %63 = vmatpush1.msra.mxu0 0.0
    %64 = vmatprep.subr.mxu0 0.0
    %65 = vmatpush1.msra.mxu0 0.0
    %66 = vmatprep.subr.mxu0 0.0
    %67 = vmatpush1.msra.mxu0 0.0
    %68 = vmatprep.subr.mxu0 0.0
    %69 = vmatpush1.msra.mxu0 0.0
    %70 = vmatprep.subr.mxu0 0.0
    %71 = vmatpush1.msra.mxu0 0.0
    %72 = vmatprep.subr.mxu0 0.0
    %73 = vmatpush1.msra.mxu0 0.0
    %74 = vmatprep.subr.mxu0 0.0
    %75 = vmatpush1.msra.mxu0 0.0
    %76 = vmatprep.subr.mxu0 0.0
    %77 = vmatpush1.msra.mxu0 0.0
    %78 = vmatprep.subr.mxu0 0.0
    %79 = vmatpush1.msra.mxu0 0.0
    %80 = vmatprep.subr.mxu0 0.0
    %81 = vmatpush1.msra.mxu0 0.0
    %82 = vmatprep.subr.mxu0 0.0
    %83 = vmatpush1.msra.mxu0 0.0
    %84 = vmatprep.subr.mxu0 0.0
    %85 = vmatpush1.msra.mxu0 0.0
    %86 = vmatprep.subr.mxu0 0.0
    %87 = vmatpush1.msra.mxu0 0.0
    %88 = vmatprep.subr.mxu0 0.0
    %89 = vmatpush1.msra.mxu0 0.0
    %90 = vmatprep.subr.mxu0 0.0
    %91 = vmatpush1.msra.mxu0 0.0
    %92 = vmatprep.subr.mxu0 0.0
    %93 = vmatpush1.msra.mxu0 0.0
    %94 = vmatprep.subr.mxu0 0.0
    %95 = vmatpush1.msra.mxu0 0.0
    %96 = vmatprep.subr.mxu0 0.0
    %97 = vmatpush1.msra.mxu0 0.0
    %98 = vmatprep.subr.mxu0 0.0
    %99 = vmatpush1.msra.mxu0 0.0
    %100 = vmatprep.subr.mxu0 0.0
    %101 = vmatpush1.msra.mxu0 0.0
    %102 = vmatprep.subr.mxu0 0.0
    %103 = vmatpush1.msra.mxu0 0.0
    %104 = vmatprep.subr.mxu0 0.0
    %105 = vmatpush1.msra.mxu0 0.0
    %106 = vmatprep.subr.mxu0 0.0
    %107 = vmatpush1.msra.mxu0 0.0
    %108 = vmatprep.subr.mxu0 0.0
    %109 = vmatpush1.msra.mxu0 0.0
    %110 = vmatprep.mubr.f32.mxu0 0.0
    %111 = vmatmul.mubr.f32.gmra.mrb[0].mxu0 %v40
    %v112 = vpop.f32.mrb[0].mxu0
    %v113 = vadd.f32 0.0, %v112
    %v114 = vpop.f32.mrb[0].mxu0
    %115 = vdwg.mxu0
    %vm116 = vcmask 48128
    %v118 = vsel %vm116, %v33, 0
    %vm120 = vcmask 1045504
    %v122 = vsel %vm120, %v34, 0
    %124 = vmatprep.subr.mxu0 0.0
    %125 = vmatpush1.msra.mxu0 %v122
    %126 = vmatprep.subr.mxu0 0.0
    %127 = vmatpush1.msra.mxu0 0.0
    %128 = vmatprep.subr.mxu0 0.0
    %129 = vmatpush1.msra.mxu0 0.0
    %130 = vmatprep.subr.mxu0 0.0
    %131 = vmatpush1.msra.mxu0 0.0
    %132 = vmatprep.subr.mxu0 0.0
    %133 = vmatpush1.msra.mxu0 0.0
    %134 = vmatprep.subr.mxu0 0.0
    %135 = vmatpush1.msra.mxu0 0.0
    %136 = vmatprep.subr.mxu0 0.0
    %137 = vmatpush1.msra.mxu0 0.0
    %138 = vmatprep.subr.mxu0 0.0
    %139 = vmatpush1.msra.mxu0 0.0
    %140 = vmatprep.subr.mxu0 0.0
    %141 = vmatpush1.msra.mxu0 0.0
    %142 = vmatprep.subr.mxu0 0.0
    %143 = vmatpush1.msra.mxu0 0.0
    %144 = vmatprep.subr.mxu0 0.0
    %145 = vmatpush1.msra.mxu0 0.0
    %146 = vmatprep.subr.mxu0 0.0
    %147 = vmatpush1.msra.mxu0 0.0
    %148 = vmatprep.subr.mxu0 0.0
    %149 = vmatpush1.msra.mxu0 0.0
    %150 = vmatprep.subr.mxu0 0.0
    %151 = vmatpush1.msra.mxu0 0.0
    %152 = vmatprep.subr.mxu0 0.0
    %153 = vmatpush1.msra.mxu0 0.0
    %154 = vmatprep.subr.mxu0 0.0
    %155 = vmatpush1.msra.mxu0 0.0
    %156 = vmatprep.subr.mxu0 0.0
    %157 = vmatpush1.msra.mxu0 0.0
    %158 = vmatprep.subr.mxu0 0.0
    %159 = vmatpush1.msra.mxu0 0.0
    %160 = vmatprep.subr.mxu0 0.0
    %161 = vmatpush1.msra.mxu0 0.0
    %162 = vmatprep.subr.mxu0 0.0
    %163 = vmatpush1.msra.mxu0 0.0
    %164 = vmatprep.subr.mxu0 0.0
    %165 = vmatpush1.msra.mxu0 0.0
    %166 = vmatprep.subr.mxu0 0.0
    %167 = vmatpush1.msra.mxu0 0.0
    %168 = vmatprep.subr.mxu0 0.0
    %169 = vmatpush1.msra.mxu0 0.0
    %170 = vmatprep.subr.mxu0 0.0
    %171 = vmatpush1.msra.mxu0 0.0
    %172 = vmatprep.subr.mxu0 0.0
    %173 = vmatpush1.msra.mxu0 0.0
    %174 = vmatprep.subr.mxu0 0.0
    %175 = vmatpush1.msra.mxu0 0.0
    %176 = vmatprep.subr.mxu0 0.0
    %177 = vmatpush1.msra.mxu0 0.0
    %178 = vmatprep.subr.mxu0 0.0
    %179 = vmatpush1.msra.mxu0 0.0
    %180 = vmatprep.subr.mxu0 0.0
    %181 = vmatpush1.msra.mxu0 0.0
    %182 = vmatprep.subr.mxu0 0.0
    %183 = vmatpush1.msra.mxu0 0.0
    %184 = vmatprep.subr.mxu0 0.0
    %185 = vmatpush1.msra.mxu0 0.0
    %186 = vmatprep.subr.mxu0 0.0
    %187 = vmatpush1.msra.mxu0 0.0
    %188 = vmatprep.mubr.f32.mxu0 0.0
    %189 = vmatmul.mubr.f32.gmra.mrb[0].mxu0 %v118
    %v190 = vpop.f32.mrb[0].mxu0
    %v191 = vadd.f32 %v113, %v190
    %v192 = vpop.f32.mrb[0].mxu0
    %193 = vdwg.mxu0
    %v194 = vld [vmem:[%s4] sm:$0x1]
    %v196 = vlaneseq
    %v197 = vshrl.u32 %v196, 7
    %v198 = vsub.s32 0, %v197
    %v199 = vrot.slane %v194, %v198
    %v201 = vadd.f32 %v191, %v199
    %v202 = vmul.f32 %v201, 0.01
    %v203 = vmax.f32 %v201, %v202
    %v204 = vld [vmem:[%s5] sm:$0xff]
    %v205 = vld [vmem:[%s5 + $0x8] sm:$0xff]
    %v206 = vld [vmem:[%s5 + $0x10] sm:$0xff]
    %v207 = vld [vmem:[%s5 + $0x18] sm:$0xff]
    %v208 = vld [vmem:[%s6] sm:$0x1]
    %v210 = vlaneseq
    %v211 = vshrl.u32 %v210, 7
    %v212 = vsub.s32 0, %v211
    %v213 = vrot.slane %v208, %v212
    %vm215 = vcmask 261120
    %v217 = vsel %vm215, %v203, 0
    %219 = vmatprep.subr.mxu0 0.0
    %220 = vmatpush1.msra.mxu0 %v204
    %221 = vmatprep.subr.mxu0 0.0
    %222 = vmatpush1.msra.mxu0 %v205
    %223 = vmatprep.subr.mxu0 0.0
    %224 = vmatpush1.msra.mxu0 %v206
    %225 = vmatprep.subr.mxu0 0.0
    %226 = vmatpush1.msra.mxu0 %v207
    %227 = vmatprep.subr.mxu0 0.0
    %228 = vmatpush1.msra.mxu0 0.0
    %229 = vmatprep.subr.mxu0 0.0
    %230 = vmatpush1.msra.mxu0 0.0
    %231 = vmatprep.subr.mxu0 0.0
    %232 = vmatpush1.msra.mxu0 0.0
    %233 = vmatprep.subr.mxu0 0.0
    %234 = vmatpush1.msra.mxu0 0.0
    %235 = vmatprep.subr.mxu0 0.0
    %236 = vmatpush1.msra.mxu0 0.0
    %237 = vmatprep.subr.mxu0 0.0
    %238 = vmatpush1.msra.mxu0 0.0
    %239 = vmatprep.subr.mxu0 0.0
    %240 = vmatpush1.msra.mxu0 0.0
    %241 = vmatprep.subr.mxu0 0.0
    %242 = vmatpush1.msra.mxu0 0.0
    %243 = vmatprep.subr.mxu0 0.0
    %244 = vmatpush1.msra.mxu0 0.0
    %245 = vmatprep.subr.mxu0 0.0
    %246 = vmatpush1.msra.mxu0 0.0
    %247 = vmatprep.subr.mxu0 0.0
    %248 = vmatpush1.msra.mxu0 0.0
    %249 = vmatprep.subr.mxu0 0.0
    %250 = vmatpush1.msra.mxu0 0.0
    %251 = vmatprep.subr.mxu0 0.0
    %252 = vmatpush1.msra.mxu0 0.0
    %253 = vmatprep.subr.mxu0 0.0
    %254 = vmatpush1.msra.mxu0 0.0
    %255 = vmatprep.subr.mxu0 0.0
    %256 = vmatpush1.msra.mxu0 0.0
    %257 = vmatprep.subr.mxu0 0.0
    %258 = vmatpush1.msra.mxu0 0.0
    %259 = vmatprep.subr.mxu0 0.0
    %260 = vmatpush1.msra.mxu0 0.0
    %261 = vmatprep.subr.mxu0 0.0
    %262 = vmatpush1.msra.mxu0 0.0
    %263 = vmatprep.subr.mxu0 0.0
    %264 = vmatpush1.msra.mxu0 0.0
    %265 = vmatprep.subr.mxu0 0.0
    %266 = vmatpush1.msra.mxu0 0.0
    %267 = vmatprep.subr.mxu0 0.0
    %268 = vmatpush1.msra.mxu0 0.0
    %269 = vmatprep.subr.mxu0 0.0
    %270 = vmatpush1.msra.mxu0 0.0
    %271 = vmatprep.subr.mxu0 0.0
    %272 = vmatpush1.msra.mxu0 0.0
    %273 = vmatprep.subr.mxu0 0.0
    %274 = vmatpush1.msra.mxu0 0.0
    %275 = vmatprep.subr.mxu0 0.0
    %276 = vmatpush1.msra.mxu0 0.0
    %277 = vmatprep.subr.mxu0 0.0
    %278 = vmatpush1.msra.mxu0 0.0
    %279 = vmatprep.subr.mxu0 0.0
    %280 = vmatpush1.msra.mxu0 0.0
    %281 = vmatprep.subr.mxu0 0.0
    %282 = vmatpush1.msra.mxu0 0.0
    %283 = vmatprep.mubr.f32.mxu0 0.0
    %284 = vmatmul.mubr.f32.gmra.mrb[0].mxu0 %v217
    %v285 = vpop.f32.mrb[0].mxu0
    %v286 = vadd.f32 %v213, %v285
    %v287 = vpop.f32.mrb[0].mxu0
    %288 = vdwg.mxu0
    %v289 = vmul.f32 %v286, 0.01
    %v290 = vmax.f32 %v286, %v289
    %v291 = vld [vmem:[%s7] sm:$0xff]
    %v292 = vld [vmem:[%s7 + $0x8] sm:$0xff]
    %v293 = vld [vmem:[%s7 + $0x10] sm:$0xff]
    %v294 = vld [vmem:[%s7 + $0x18] sm:$0xff]
    %v295 = vld [vmem:[%s8] sm:$0x1]
    %v297 = vlaneseq
    %v298 = vshrl.u32 %v297, 7
    %v299 = vsub.s32 0, %v298
    %v300 = vrot.slane %v295, %v299
    %v303 = vsel %vm215, %v290, 0
    %305 = vmatprep.subr.mxu0 0.0
    %306 = vmatpush1.msra.mxu0 %v291
    %307 = vmatprep.subr.mxu0 0.0
    %308 = vmatpush1.msra.mxu0 %v292
    %309 = vmatprep.subr.mxu0 0.0
    %310 = vmatpush1.msra.mxu0 %v293
    %311 = vmatprep.subr.mxu0 0.0
    %312 = vmatpush1.msra.mxu0 %v294
    %313 = vmatprep.subr.mxu0 0.0
    %314 = vmatpush1.msra.mxu0 0.0
    %315 = vmatprep.subr.mxu0 0.0
    %316 = vmatpush1.msra.mxu0 0.0
    %317 = vmatprep.subr.mxu0 0.0
    %318 = vmatpush1.msra.mxu0 0.0
    %319 = vmatprep.subr.mxu0 0.0
    %320 = vmatpush1.msra.mxu0 0.0
    %321 = vmatprep.subr.mxu0 0.0
    %322 = vmatpush1.msra.mxu0 0.0
    %323 = vmatprep.subr.mxu0 0.0
    %324 = vmatpush1.msra.mxu0 0.0
    %325 = vmatprep.subr.mxu0 0.0
    %326 = vmatpush1.msra.mxu0 0.0
    %327 = vmatprep.subr.mxu0 0.0
    %328 = vmatpush1.msra.mxu0 0.0
    %329 = vmatprep.subr.mxu0 0.0
    %330 = vmatpush1.msra.mxu0 0.0
    %331 = vmatprep.subr.mxu0 0.0
    %332 = vmatpush1.msra.mxu0 0.0
    %333 = vmatprep.subr.mxu0 0.0
    %334 = vmatpush1.msra.mxu0 0.0
    %335 = vmatprep.subr.mxu0 0.0
    %336 = vmatpush1.msra.mxu0 0.0
    %337 = vmatprep.subr.mxu0 0.0
    %338 = vmatpush1.msra.mxu0 0.0
    %339 = vmatprep.subr.mxu0 0.0
    %340 = vmatpush1.msra.mxu0 0.0
    %341 = vmatprep.subr.mxu0 0.0
    %342 = vmatpush1.msra.mxu0 0.0
    %343 = vmatprep.subr.mxu0 0.0
    %344 = vmatpush1.msra.mxu0 0.0
    %345 = vmatprep.subr.mxu0 0.0
    %346 = vmatpush1.msra.mxu0 0.0
    %347 = vmatprep.subr.mxu0 0.0
    %348 = vmatpush1.msra.mxu0 0.0
    %349 = vmatprep.subr.mxu0 0.0
    %350 = vmatpush1.msra.mxu0 0.0
    %351 = vmatprep.subr.mxu0 0.0
    %352 = vmatpush1.msra.mxu0 0.0
    %353 = vmatprep.subr.mxu0 0.0
    %354 = vmatpush1.msra.mxu0 0.0
    %355 = vmatprep.subr.mxu0 0.0
    %356 = vmatpush1.msra.mxu0 0.0
    %357 = vmatprep.subr.mxu0 0.0
    %358 = vmatpush1.msra.mxu0 0.0
    %359 = vmatprep.subr.mxu0 0.0
    %360 = vmatpush1.msra.mxu0 0.0
    %361 = vmatprep.subr.mxu0 0.0
    %362 = vmatpush1.msra.mxu0 0.0
    %363 = vmatprep.subr.mxu0 0.0
    %364 = vmatpush1.msra.mxu0 0.0
    %365 = vmatprep.subr.mxu0 0.0
    %366 = vmatpush1.msra.mxu0 0.0
    %367 = vmatprep.subr.mxu0 0.0
    %368 = vmatpush1.msra.mxu0 0.0
    %369 = vmatprep.mubr.f32.mxu0 0.0
    %370 = vmatmul.mubr.f32.gmra.mrb[0].mxu0 %v303
    %v371 = vpop.f32.mrb[0].mxu0
    %v372 = vadd.f32 %v300, %v371
    %v373 = vpop.f32.mrb[0].mxu0
    %374 = vdwg.mxu0
    %vm375 = vcmask 64512
    %376 = vst.msk [vmem:[#allocation2] sm:$0xff] %vm375, %v372
    // Predicated region
    $region38: #{feedforward.1} parent=1 // pred_check
      _
    $region39: #{feedforward.1} parent=1 // pred_check_branch
      %378 = sbr.rel (0) target = $region41
    $region40: #{feedforward.1} parent=1 // pred_region
      %s380 = ssub.s32 128, 128
      %381 = vsyncadd [#allocation3], %s380
      %s383 = sshll.u32 [#allocation2], 4
      %s384 = int_to_ptr.vmem [resolvable:$true] %s383
      %386 = dma.vmem_to_hbm [thread:$0]  %s384, 128, %s9, [#allocation3]
    $region41: #{feedforward.1} parent=1 // pred_fallthru
      _
    // Predicated region
    $region42: #{feedforward.1} parent=1 // pred_check
      _
    $region43: #{feedforward.1} parent=1 // pred_check_branch
      %388 = sbr.rel (0) target = $region45
    $region44: #{feedforward.1} parent=1 // pred_region
      %389 = dma.done [#allocation3], 128
    $region45: #{feedforward.1} parent=1 // pred_fallthru
      _
    %390 = vsyncpa [#allocation3], 1

</llo_original>
